<compile_context>
chip_gen: v7x
topology: tpu7x:2x2x1
jax: 0.10.0
libtpu: 0.0.40
codegen_flags: <defaults>
</compile_context>

<pallas_src>
import functools

import jax
import jax.numpy as jnp
from jax import lax
from jax.experimental import pallas as pl
from jax.experimental.pallas import tpu as pltpu


# --------------------------------- kernel ------------------------------------

def residual_block_kernel(*refs, Np, H, W, C, G, eps=1e-5):
    """One grid step: Np samples folded into a lane-dense (Np*H, W*C) slab."""
    it = iter(refs)
    x_ref, w1_ref, w2_ref, p_ref = next(it), next(it), next(it), next(it)
    gsel_ref = next(it) if G > 1 else None      # (WC, WC) 0/1 group selection
    rd2_ref = next(it) if Np > 1 else None      # (2R, 2R) per-sample reduce/bcast
    out_ref = next(it)

    R = Np * H
    x = x_ref[...]                              # (R, WC) f32

    # Packed per-lane parameter rows: [b1, g1, be1, b2, g2, be2, 0, 0].
    p = p_ref[...]                              # (8, WC) f32
    b1, g1, be1 = p[0:1], p[1:2], p[2:3]
    b2, g2, be2 = p[3:4], p[4:5], p[5:6]

    rowh = lax.broadcasted_iota(jnp.int32, (R, 1), 0) % H   # row within sample

    def row_shift(a, dy):
        # result[r, :] = a[r + dy, :] when (r % H) + dy stays in [0, H); else 0.
        # The mask also zeroes the roll wrap between folded samples.
        rolled = pltpu.roll(a, shift=(-dy) % R, axis=0)
        valid = jnp.logical_and(rowh + dy >= 0, rowh + dy < H)
        return jnp.where(valid, rolled, 0.0)

    def conv3x3(a, w_ref, bias_row):
        # Single MXU matmul per conv: (R, 3*WC) @ (3*WC, WC) -> (R, WC).
        # Operands take the banded weight's dtype (bf16 by default); f32 accum.
        lhs = jnp.concatenate([row_shift(a, -1), a, row_shift(a, 1)], axis=-1)
        return jnp.dot(lhs.astype(w_ref.dtype), w_ref[...],
                       preferred_element_type=jnp.float32) + bias_row

    inv_cnt = 1.0 / float(H * W * (C // G))

    def gn_relu(y, gamma_row, beta_row):
        # GroupNorm stats in f32, single-pass var = E[x^2] - mean^2, clamped.
        # sum(y) and sum(y*y) are stacked so each GroupNorm costs at most two
        # small serial MXU pushes (none when Np == 1 and G == 1).
        if Np == 1:
            stats = jnp.concatenate(
                [jnp.sum(y, axis=0, keepdims=True),
                 jnp.sum(y * y, axis=0, keepdims=True)], axis=0)        # (2, WC)
        else:
            z = jnp.concatenate([y, y * y], axis=0)                     # (2R, WC)
            # Block-diagonal same-sample indicator: one matmul both reduces the
            # rows of each sample and broadcasts the sums back to its rows.
            stats = jnp.dot(rd2_ref[...], z,
                            preferred_element_type=jnp.float32)         # (2R, WC)
        if G > 1:
            gstats = jnp.dot(stats, gsel_ref[...],
                             preferred_element_type=jnp.float32) * inv_cnt
        else:
            gstats = jnp.sum(stats, axis=-1, keepdims=True) * inv_cnt   # XLU
        half = stats.shape[0] // 2
        mean, ex2 = gstats[:half], gstats[half:]
        var = jnp.maximum(ex2 - mean * mean, 0.0)
        scale = lax.rsqrt(var + eps) * gamma_row
        shift = beta_row - mean * scale
        return jnp.maximum(y * scale + shift, 0.0)

    y = gn_relu(conv3x3(x, w1_ref, b1), g1, be1)
    y = gn_relu(conv3x3(y, w2_ref, b2), g2, be2)

    # Residual add (stride=1, in_planes == planes) + ReLU; lane-dense store.
    out_ref[...] = jnp.maximum(x + y, 0.0)


# ------------------------------ parameter prep --------------------------------
# Hoisted out of the per-call path: run once per parameter set.

def _banded_conv_weight(w_oihw, W, dtype):
    """Fold the 3x3 conv into a (3*W*Cin, W*Cout) banded matrix.

    B[ky*(W*Cin) + w'*Cin + ci, w*Cout + co] = w[co, ci, ky, w'-w+1]
    when |w'-w| <= 1 else 0 (horizontal zero padding is implicit in the band).
    """
    Cout, Cin, KH, KW = w_oihw.shape
    assert KH == 3 and KW == 3
    w_hwio = jnp.transpose(w_oihw, (2, 3, 1, 0))             # (3, 3, Cin, Cout)
    wp = jnp.arange(W)[:, None]                              # source column w'
    wo = jnp.arange(W)[None, :]                              # output column w
    kx = wp - wo + 1                                         # (W, W)
    valid = (kx >= 0) & (kx <= 2)
    b = w_hwio[:, jnp.clip(kx, 0, 2), :, :]                  # (3, W, W, Cin, Cout)
    b = jnp.where(valid[None, :, :, None, None], b, 0.0)
    b = jnp.transpose(b, (0, 1, 3, 2, 4))                    # (ky, w', ci, w, co)
    return b.reshape(3 * W * Cin, W * Cout).astype(dtype)


def _tile_row(v, W):
    """Per-channel (C,) vector -> per-lane (1, W*C) row, lane = w*C + c."""
    return jnp.tile(v.reshape(1, -1), (1, W)).astype(jnp.float32)


def prepare_params(params, W, num_groups, *, use_bf16=True):
    """Precompute banded conv weights, packed param rows and gsel."""
    C = params["w1"].shape[0]
    WC = W * C
    wdt = jnp.bfloat16 if use_bf16 else jnp.float32
    w1b = _banded_conv_weight(params["w1"], W, wdt)
    w2b = _banded_conv_weight(params["w2"], W, wdt)
    rows = [_tile_row(params[k], W) for k in ("b1", "g1", "be1", "b2", "g2", "be2")]
    prow = jnp.concatenate(rows + [jnp.zeros((2, WC), jnp.float32)], axis=0)  # (8, WC)
    gsel = None
    if num_groups > 1:
        lane = jnp.arange(WC)
        grp = (lane % C) // (C // num_groups)
        gsel = (grp[:, None] == grp[None, :]).astype(jnp.float32)             # (WC, WC)
    return {"w1b": w1b, "w2b": w2b, "prow": prow, "gsel": gsel}


# -------------------------------- apply wrapper --------------------------------

def _default_grid_steps(N):
    """#grid steps = #TensorCores per device (2 on v4/v5p/v7x, else 1)."""
    cores = 1
    try:
        kind = str(jax.devices()[0].device_kind).lower()
        if any(t in kind for t in ("v4", "v5p", "7x", "v7")):
            cores = 2
    except Exception:
        pass
    steps = cores if (N % cores == 0) else 1
    return max(1, min(steps, N))


@functools.partial(jax.jit, static_argnames=("num_groups", "grid_steps"))
def residual_block_pallas(x_nchw, prepped, *, num_groups, grid_steps=1):
    """x_nchw: (N, C, H, W) float32.  Returns (N, C, H, W) float32."""
    N, C, H, W = x_nchw.shape
    WC = W * C
    steps = grid_steps
    assert N % steps == 0
    Np = N // steps
    R = Np * H
    assert C % num_groups == 0

    # NCHW -> lane-dense (steps, Np*H, W*C).  Pure layout (fused under jit).
    x2d = jnp.transpose(x_nchw, (0, 2, 3, 1)).reshape(steps, R, WC)

    args = [x2d, prepped["w1b"], prepped["w2b"], prepped["prow"]]
    in_specs = [
        pl.BlockSpec((None, R, WC), lambda s: (s, 0, 0)),   # x slab (per step)
        pl.BlockSpec((3 * WC, WC), lambda s: (0, 0)),       # banded w1
        pl.BlockSpec((3 * WC, WC), lambda s: (0, 0)),       # banded w2
        pl.BlockSpec((8, WC), lambda s: (0, 0)),            # packed param rows
    ]
    if num_groups > 1:
        args.append(prepped["gsel"])
        in_specs.append(pl.BlockSpec((WC, WC), lambda s: (0, 0)))
    if Np > 1:
        # Block-diagonal same-sample indicator over the stacked [y ; y*y] rows
        # (constant; folded at compile time).
        r2 = jnp.arange(2 * R)
        same_sample = (r2[:, None] % R) // H == (r2[None, :] % R) // H
        same_half = (r2[:, None] // R) == (r2[None, :] // R)
        rd2 = (same_sample & same_half).astype(jnp.float32)
        args.append(rd2)
        in_specs.append(pl.BlockSpec((2 * R, 2 * R), lambda s: (0, 0)))

    kernel = functools.partial(residual_block_kernel,
                               Np=Np, H=H, W=W, C=C, G=num_groups, eps=1e-5)

    out2d = pl.pallas_call(
        kernel,
        out_shape=jax.ShapeDtypeStruct((steps, R, WC), jnp.float32),
        grid=(steps,),
        in_specs=in_specs,
        out_specs=pl.BlockSpec((None, R, WC), lambda s: (s, 0, 0)),
        compiler_params=pltpu.CompilerParams(
            dimension_semantics=("parallel",)),             # 2 TCs on v4/v5p/v7x
    )(*args)

    return jnp.transpose(out2d.reshape(N, H, W, C), (0, 3, 1, 2))


# ----------------------------- pure-JAX reference ------------------------------

def _ref_group_norm(x, gamma, beta, G, eps=1e-5):
    N, C, H, W = x.shape
    xg = x.reshape(N, G, -1)
    mean = xg.mean(-1, keepdims=True)
    var = xg.var(-1, keepdims=True)
    xn = ((xg - mean) / jnp.sqrt(var + eps)).reshape(N, C, H, W)
    return xn * gamma[None, :, None, None] + beta[None, :, None, None]


def residual_block_ref(x, params, num_groups):
    conv = lambda inp, w, b: lax.conv_general_dilated(
        inp, w, window_strides=(1, 1), padding=((1, 1), (1, 1)),
        dimension_numbers=("NCHW", "OIHW", "NCHW")) + b[None, :, None, None]
    y = conv(x, params["w1"], params["b1"])
    y = jax.nn.relu(_ref_group_norm(y, params["g1"], params["be1"], num_groups))
    y = conv(y, params["w2"], params["b2"])
    y = jax.nn.relu(_ref_group_norm(y, params["g2"], params["be2"], num_groups))
    return jax.nn.relu(x + y)


# ---------------------------------- main ---------------------------------------

def _run_case(key, N, C, H, W, *, use_bf16, atol, rtol=None, grid_steps=None):
    num_groups = max(C // 8, 1)          # as in the PyTorch module (planes // 8)
    ks = jax.random.split(key, 9)
    params = {
        "w1": 0.1 * jax.random.normal(ks[0], (C, C, 3, 3), jnp.float32),
        "b1": 0.1 * jax.random.normal(ks[1], (C,), jnp.float32),
        "w2": 0.1 * jax.random.normal(ks[2], (C, C, 3, 3), jnp.float32),
        "b2": 0.1 * jax.random.normal(ks[3], (C,), jnp.float32),
        "g1": 1.0 + 0.1 * jax.random.normal(ks[4], (C,), jnp.float32),
        "be1": 0.1 * jax.random.normal(ks[5], (C,), jnp.float32),
        "g2": 1.0 + 0.1 * jax.random.normal(ks[6], (C,), jnp.float32),
        "be2": 0.1 * jax.random.normal(ks[7], (C,), jnp.float32),
    }
    x = jax.random.normal(ks[8], (N, C, H, W), jnp.float32)

    prepped = prepare_params(params, W, num_groups, use_bf16=use_bf16)
    steps = grid_steps if grid_steps is not None else _default_grid_steps(N)
    out = jax.block_until_ready(
        residual_block_pallas(x, prepped, num_groups=num_groups, grid_steps=steps))
    ref = jax.block_until_ready(residual_block_ref(x, params, num_groups))
    assert out.shape == ref.shape == (N, C, H, W)
    err = float(jnp.max(jnp.abs(out - ref)))
    rtol = atol if rtol is None else rtol
    assert jnp.allclose(out, ref, atol=atol, rtol=rtol), f"max abs err {err}"


if __name__ == "__main__":
    key = jax.random.PRNGKey(0)
    k1, k2, k3 = jax.random.split(key, 3)

    # Main case: in_planes = planes = 8, H = W = 16, N = 2 (W*C = 128, 1 group).
    # Default bf16 conv operands -> looser tolerance (structure is validated
    # exactly by the f32 cases below).
    _run_case(k1, 2, 8, 16, 16, use_bf16=True, atol=1e-1)

    # Exact-f32 validations of every kernel code path at 1e-4:
    #   num_groups > 1 (gsel path), single sample per step.
    _run_case(k2, 1, 16, 8, 8, use_bf16=False, atol=1e-4)
    #   batch folding (Np = 2, single-TC style), 1 group.
    _run_case(k1, 2, 8, 16, 16, use_bf16=False, atol=1e-4, grid_steps=1)
    #   batch folding + num_groups > 1 together.
    _run_case(k3, 2, 16, 8, 8, use_bf16=False, atol=1e-4, grid_steps=1)

    print("KERNEL_OK")
</pallas_src>

<mosaic_0001>
module attributes {stable_mosaic.version = 11 : i64} {
  func.func @residual_block_kernel(%arg0: i32, %arg1: memref<1x32x128xf32, #tpu.memory_space<vmem>>, %arg2: memref<384x128xbf16, #tpu.memory_space<vmem>>, %arg3: memref<384x128xbf16, #tpu.memory_space<vmem>>, %arg4: memref<8x128xf32, #tpu.memory_space<vmem>>, %arg5: memref<64x64xf32, #tpu.memory_space<vmem>>, %arg6: memref<1x32x128xf32, #tpu.memory_space<vmem>>) attributes {dimension_semantics = [#tpu.dimension_semantics<parallel>], iteration_bounds = array<i64: 1>, scalar_prefetch = 0 : i64, scratch_operands = 0 : i64, tpu.core_type = #tpu.core_type<tc>, window_params = [{transform_indices = @transform_0, window_bounds = array<i64: 1, 32, 128>}, {pipeline_mode = #tpu.pipeline_mode<synchronous>, transform_indices = @transform_1, window_bounds = array<i64: 384, 128>}, {pipeline_mode = #tpu.pipeline_mode<synchronous>, transform_indices = @transform_2, window_bounds = array<i64: 384, 128>}, {pipeline_mode = #tpu.pipeline_mode<synchronous>, transform_indices = @transform_3, window_bounds = array<i64: 8, 128>}, {pipeline_mode = #tpu.pipeline_mode<synchronous>, transform_indices = @transform_4, window_bounds = array<i64: 64, 64>}, {transform_indices = @transform_5, window_bounds = array<i64: 1, 32, 128>}]} {
    %c0 = arith.constant 0 : index
    %c0_0 = arith.constant 0 : index
    %c0_1 = arith.constant 0 : index
    %0 = vector.load %arg1[%c0, %c0_0, %c0_1] : memref<1x32x128xf32, #tpu.memory_space<vmem>>, vector<1x32x128xf32>
    %1 = vector.shape_cast %0 : vector<1x32x128xf32> to vector<32x128xf32>
    %c0_2 = arith.constant 0 : index
    %c0_3 = arith.constant 0 : index
    %2 = vector.load %arg4[%c0_2, %c0_3] : memref<8x128xf32, #tpu.memory_space<vmem>>, vector<8x128xf32>
    %3 = vector.extract_strided_slice %2 {offsets = [0, 0], sizes = [1, 128], strides = [1, 1]} : vector<8x128xf32> to vector<1x128xf32>
    %4 = vector.extract_strided_slice %2 {offsets = [1, 0], sizes = [1, 128], strides = [1, 1]} : vector<8x128xf32> to vector<1x128xf32>
    %5 = vector.extract_strided_slice %2 {offsets = [2, 0], sizes = [1, 128], strides = [1, 1]} : vector<8x128xf32> to vector<1x128xf32>
    %6 = vector.extract_strided_slice %2 {offsets = [3, 0], sizes = [1, 128], strides = [1, 1]} : vector<8x128xf32> to vector<1x128xf32>
    %7 = vector.extract_strided_slice %2 {offsets = [4, 0], sizes = [1, 128], strides = [1, 1]} : vector<8x128xf32> to vector<1x128xf32>
    %8 = vector.extract_strided_slice %2 {offsets = [5, 0], sizes = [1, 128], strides = [1, 1]} : vector<8x128xf32> to vector<1x128xf32>
    %9 = tpu.iota {dimensions = array<i32: 0>} : vector<32x1xi32>
    %c16_i32 = arith.constant 16 : i32
    %c0_i32 = arith.constant 0 : i32
    %10 = arith.cmpi eq, %c16_i32, %c0_i32 : i32
    %c1_i32 = arith.constant 1 : i32
    %11 = arith.select %10, %c1_i32, %c16_i32 : i32
    %12 = vector.broadcast %11 : i32 to vector<32x1xi32>
    %13 = arith.remsi %9, %12 : vector<32x1xi32>
    %c0_i32_4 = arith.constant 0 : i32
    %14 = vector.broadcast %c0_i32_4 : i32 to vector<32x1xi32>
    %15 = arith.cmpi ne, %13, %14 : vector<32x1xi32>
    %c0_i32_5 = arith.constant 0 : i32
    %16 = vector.broadcast %c0_i32_5 : i32 to vector<32x1xi32>
    %17 = arith.cmpi slt, %13, %16 : vector<32x1xi32>
    %c0_i32_6 = arith.constant 0 : i32
    %18 = arith.cmpi slt, %11, %c0_i32_6 : i32
    %19 = vector.broadcast %18 : i1 to vector<32x1xi1>
    %20 = vector.broadcast %19 : vector<32x1xi1> to vector<32x1xi1>
    %21 = arith.xori %17, %20 : vector<32x1xi1>
    %22 = arith.andi %21, %15 : vector<32x1xi1>
    %23 = vector.broadcast %11 : i32 to vector<32x1xi32>
    %24 = arith.addi %13, %23 : vector<32x1xi32>
    %25 = arith.select %22, %24, %13 : vector<32x1xi1>, vector<32x1xi32>
    %c1_i32_7 = arith.constant 1 : i32
    %26 = tpu.dynamic_rotate %1 by %c1_i32_7 dim 0 : vector<32x128xf32>, i32 -> vector<32x128xf32>
    %c-1_i32 = arith.constant -1 : i32
    %27 = vector.broadcast %c-1_i32 : i32 to vector<32x1xi32>
    %28 = arith.addi %25, %27 : vector<32x1xi32>
    %c0_i32_8 = arith.constant 0 : i32
    %29 = vector.broadcast %c0_i32_8 : i32 to vector<32x1xi32>
    %30 = arith.cmpi sge, %28, %29 : vector<32x1xi32>
    %c-1_i32_9 = arith.constant -1 : i32
    %31 = vector.broadcast %c-1_i32_9 : i32 to vector<32x1xi32>
    %32 = arith.addi %25, %31 : vector<32x1xi32>
    %c16_i32_10 = arith.constant 16 : i32
    %33 = vector.broadcast %c16_i32_10 : i32 to vector<32x1xi32>
    %34 = arith.cmpi slt, %32, %33 : vector<32x1xi32>
    %35 = arith.andi %30, %34 : vector<32x1xi1>
    %cst = arith.constant 0.000000e+00 : f32
    %36 = vector.shape_cast %35 : vector<32x1xi1> to vector<32x1xi1>
    %37 = vector.broadcast %36 : vector<32x1xi1> to vector<32x128xi1>
    %38 = vector.broadcast %cst : f32 to vector<32x128xf32>
    %39 = arith.select %37, %26, %38 : vector<32x128xi1>, vector<32x128xf32>
    %c31_i32 = arith.constant 31 : i32
    %40 = tpu.dynamic_rotate %1 by %c31_i32 dim 0 : vector<32x128xf32>, i32 -> vector<32x128xf32>
    %c1_i32_11 = arith.constant 1 : i32
    %41 = vector.broadcast %c1_i32_11 : i32 to vector<32x1xi32>
    %42 = arith.addi %25, %41 : vector<32x1xi32>
    %c0_i32_12 = arith.constant 0 : i32
    %43 = vector.broadcast %c0_i32_12 : i32 to vector<32x1xi32>
    %44 = arith.cmpi sge, %42, %43 : vector<32x1xi32>
    %c1_i32_13 = arith.constant 1 : i32
    %45 = vector.broadcast %c1_i32_13 : i32 to vector<32x1xi32>
    %46 = arith.addi %25, %45 : vector<32x1xi32>
    %c16_i32_14 = arith.constant 16 : i32
    %47 = vector.broadcast %c16_i32_14 : i32 to vector<32x1xi32>
    %48 = arith.cmpi slt, %46, %47 : vector<32x1xi32>
    %49 = arith.andi %44, %48 : vector<32x1xi1>
    %cst_15 = arith.constant 0.000000e+00 : f32
    %50 = vector.shape_cast %49 : vector<32x1xi1> to vector<32x1xi1>
    %51 = vector.broadcast %50 : vector<32x1xi1> to vector<32x128xi1>
    %52 = vector.broadcast %cst_15 : f32 to vector<32x128xf32>
    %53 = arith.select %51, %40, %52 : vector<32x128xi1>, vector<32x128xf32>
    %54 = tpu.concatenate %39, %1, %53 in 1 : vector<32x128xf32>, vector<32x128xf32>, vector<32x128xf32> -> vector<32x384xf32>
    %55 = arith.truncf %54 : vector<32x384xf32> to vector<32x384xbf16>
    %c0_16 = arith.constant 0 : index
    %c0_17 = arith.constant 0 : index
    %56 = vector.load %arg2[%c0_16, %c0_17] : memref<384x128xbf16, #tpu.memory_space<vmem>>, vector<384x128xbf16>
    %cst_18 = arith.constant dense<0.000000e+00> : vector<32x128xf32>
    %57 = tpu.matmul %55, %56, %cst_18 {dimension_numbers = #tpu.dot_dimension_numbers<[1], [0], [0], [1], [0, 0, 1, 1], [], []>} : vector<32x384xbf16>, vector<384x128xbf16>, vector<32x128xf32> -> vector<32x128xf32>
    %58 = vector.broadcast %3 : vector<1x128xf32> to vector<32x128xf32>
    %59 = arith.addf %57, %58 : vector<32x128xf32>
    %60 = arith.mulf %59, %59 : vector<32x128xf32>
    %61 = tpu.concatenate %59, %60 in 0 : vector<32x128xf32>, vector<32x128xf32> -> vector<64x128xf32>
    %c0_19 = arith.constant 0 : index
    %c0_20 = arith.constant 0 : index
    %62 = vector.load %arg5[%c0_19, %c0_20] : memref<64x64xf32, #tpu.memory_space<vmem>>, vector<64x64xf32>
    %cst_21 = arith.constant dense<0.000000e+00> : vector<64x128xf32>
    %63 = tpu.matmul %62, %61, %cst_21 {dimension_numbers = #tpu.dot_dimension_numbers<[1], [0], [0], [1], [0, 0, 1, 1], [], []>} : vector<64x64xf32>, vector<64x128xf32>, vector<64x128xf32> -> vector<64x128xf32>
    %cst_22 = arith.constant dense<0.000000e+00> : vector<64xf32>
    %64 = vector.multi_reduction <add>, %63, %cst_22 [1] : vector<64x128xf32> to vector<64xf32>
    %65 = vector.shape_cast %64 : vector<64xf32> to vector<64x1xf32>
    %cst_23 = arith.constant 4.8828125E-4 : f32
    %66 = vector.broadcast %cst_23 : f32 to vector<64x1xf32>
    %67 = arith.mulf %65, %66 : vector<64x1xf32>
    %68 = vector.extract_strided_slice %67 {offsets = [0, 0], sizes = [32, 1], strides = [1, 1]} : vector<64x1xf32> to vector<32x1xf32>
    %69 = vector.extract_strided_slice %67 {offsets = [32, 0], sizes = [32, 1], strides = [1, 1]} : vector<64x1xf32> to vector<32x1xf32>
    %70 = arith.mulf %68, %68 : vector<32x1xf32>
    %71 = arith.subf %69, %70 : vector<32x1xf32>
    %cst_24 = arith.constant 0.000000e+00 : f32
    %72 = vector.broadcast %cst_24 : f32 to vector<32x1xf32>
    %73 = arith.maximumf %71, %72 : vector<32x1xf32>
    %cst_25 = arith.constant 9.99999974E-6 : f32
    %74 = vector.broadcast %cst_25 : f32 to vector<32x1xf32>
    %75 = arith.addf %73, %74 : vector<32x1xf32>
    %76 = math.rsqrt %75 : vector<32x1xf32>
    %77 = vector.broadcast %76 : vector<32x1xf32> to vector<32x128xf32>
    %78 = vector.broadcast %4 : vector<1x128xf32> to vector<32x128xf32>
    %79 = arith.mulf %77, %78 : vector<32x128xf32>
    %80 = vector.broadcast %68 : vector<32x1xf32> to vector<32x128xf32>
    %81 = arith.mulf %80, %79 : vector<32x128xf32>
    %82 = vector.broadcast %5 : vector<1x128xf32> to vector<32x128xf32>
    %83 = arith.subf %82, %81 : vector<32x128xf32>
    %84 = arith.mulf %59, %79 : vector<32x128xf32>
    %85 = arith.addf %84, %83 : vector<32x128xf32>
    %cst_26 = arith.constant 0.000000e+00 : f32
    %86 = vector.broadcast %cst_26 : f32 to vector<32x128xf32>
    %87 = arith.maximumf %85, %86 : vector<32x128xf32>
    %c1_i32_27 = arith.constant 1 : i32
    %88 = tpu.dynamic_rotate %87 by %c1_i32_27 dim 0 : vector<32x128xf32>, i32 -> vector<32x128xf32>
    %c-1_i32_28 = arith.constant -1 : i32
    %89 = vector.broadcast %c-1_i32_28 : i32 to vector<32x1xi32>
    %90 = arith.addi %25, %89 : vector<32x1xi32>
    %c0_i32_29 = arith.constant 0 : i32
    %91 = vector.broadcast %c0_i32_29 : i32 to vector<32x1xi32>
    %92 = arith.cmpi sge, %90, %91 : vector<32x1xi32>
    %c-1_i32_30 = arith.constant -1 : i32
    %93 = vector.broadcast %c-1_i32_30 : i32 to vector<32x1xi32>
    %94 = arith.addi %25, %93 : vector<32x1xi32>
    %c16_i32_31 = arith.constant 16 : i32
    %95 = vector.broadcast %c16_i32_31 : i32 to vector<32x1xi32>
    %96 = arith.cmpi slt, %94, %95 : vector<32x1xi32>
    %97 = arith.andi %92, %96 : vector<32x1xi1>
    %cst_32 = arith.constant 0.000000e+00 : f32
    %98 = vector.shape_cast %97 : vector<32x1xi1> to vector<32x1xi1>
    %99 = vector.broadcast %98 : vector<32x1xi1> to vector<32x128xi1>
    %100 = vector.broadcast %cst_32 : f32 to vector<32x128xf32>
    %101 = arith.select %99, %88, %100 : vector<32x128xi1>, vector<32x128xf32>
    %c31_i32_33 = arith.constant 31 : i32
    %102 = tpu.dynamic_rotate %87 by %c31_i32_33 dim 0 : vector<32x128xf32>, i32 -> vector<32x128xf32>
    %c1_i32_34 = arith.constant 1 : i32
    %103 = vector.broadcast %c1_i32_34 : i32 to vector<32x1xi32>
    %104 = arith.addi %25, %103 : vector<32x1xi32>
    %c0_i32_35 = arith.constant 0 : i32
    %105 = vector.broadcast %c0_i32_35 : i32 to vector<32x1xi32>
    %106 = arith.cmpi sge, %104, %105 : vector<32x1xi32>
    %c1_i32_36 = arith.constant 1 : i32
    %107 = vector.broadcast %c1_i32_36 : i32 to vector<32x1xi32>
    %108 = arith.addi %25, %107 : vector<32x1xi32>
    %c16_i32_37 = arith.constant 16 : i32
    %109 = vector.broadcast %c16_i32_37 : i32 to vector<32x1xi32>
    %110 = arith.cmpi slt, %108, %109 : vector<32x1xi32>
    %111 = arith.andi %106, %110 : vector<32x1xi1>
    %cst_38 = arith.constant 0.000000e+00 : f32
    %112 = vector.shape_cast %111 : vector<32x1xi1> to vector<32x1xi1>
    %113 = vector.broadcast %112 : vector<32x1xi1> to vector<32x128xi1>
    %114 = vector.broadcast %cst_38 : f32 to vector<32x128xf32>
    %115 = arith.select %113, %102, %114 : vector<32x128xi1>, vector<32x128xf32>
    %116 = tpu.concatenate %101, %87, %115 in 1 : vector<32x128xf32>, vector<32x128xf32>, vector<32x128xf32> -> vector<32x384xf32>
    %117 = arith.truncf %116 : vector<32x384xf32> to vector<32x384xbf16>
    %c0_39 = arith.constant 0 : index
    %c0_40 = arith.constant 0 : index
    %118 = vector.load %arg3[%c0_39, %c0_40] : memref<384x128xbf16, #tpu.memory_space<vmem>>, vector<384x128xbf16>
    %cst_41 = arith.constant dense<0.000000e+00> : vector<32x128xf32>
    %119 = tpu.matmul %117, %118, %cst_41 {dimension_numbers = #tpu.dot_dimension_numbers<[1], [0], [0], [1], [0, 0, 1, 1], [], []>} : vector<32x384xbf16>, vector<384x128xbf16>, vector<32x128xf32> -> vector<32x128xf32>
    %120 = vector.broadcast %6 : vector<1x128xf32> to vector<32x128xf32>
    %121 = arith.addf %119, %120 : vector<32x128xf32>
    %122 = arith.mulf %121, %121 : vector<32x128xf32>
    %123 = tpu.concatenate %121, %122 in 0 : vector<32x128xf32>, vector<32x128xf32> -> vector<64x128xf32>
    %c0_42 = arith.constant 0 : index
    %c0_43 = arith.constant 0 : index
    %124 = vector.load %arg5[%c0_42, %c0_43] : memref<64x64xf32, #tpu.memory_space<vmem>>, vector<64x64xf32>
    %cst_44 = arith.constant dense<0.000000e+00> : vector<64x128xf32>
    %125 = tpu.matmul %124, %123, %cst_44 {dimension_numbers = #tpu.dot_dimension_numbers<[1], [0], [0], [1], [0, 0, 1, 1], [], []>} : vector<64x64xf32>, vector<64x128xf32>, vector<64x128xf32> -> vector<64x128xf32>
    %cst_45 = arith.constant dense<0.000000e+00> : vector<64xf32>
    %126 = vector.multi_reduction <add>, %125, %cst_45 [1] : vector<64x128xf32> to vector<64xf32>
    %127 = vector.shape_cast %126 : vector<64xf32> to vector<64x1xf32>
    %cst_46 = arith.constant 4.8828125E-4 : f32
    %128 = vector.broadcast %cst_46 : f32 to vector<64x1xf32>
    %129 = arith.mulf %127, %128 : vector<64x1xf32>
    %130 = vector.extract_strided_slice %129 {offsets = [0, 0], sizes = [32, 1], strides = [1, 1]} : vector<64x1xf32> to vector<32x1xf32>
    %131 = vector.extract_strided_slice %129 {offsets = [32, 0], sizes = [32, 1], strides = [1, 1]} : vector<64x1xf32> to vector<32x1xf32>
    %132 = arith.mulf %130, %130 : vector<32x1xf32>
    %133 = arith.subf %131, %132 : vector<32x1xf32>
    %cst_47 = arith.constant 0.000000e+00 : f32
    %134 = vector.broadcast %cst_47 : f32 to vector<32x1xf32>
    %135 = arith.maximumf %133, %134 : vector<32x1xf32>
    %cst_48 = arith.constant 9.99999974E-6 : f32
    %136 = vector.broadcast %cst_48 : f32 to vector<32x1xf32>
    %137 = arith.addf %135, %136 : vector<32x1xf32>
    %138 = math.rsqrt %137 : vector<32x1xf32>
    %139 = vector.broadcast %138 : vector<32x1xf32> to vector<32x128xf32>
    %140 = vector.broadcast %7 : vector<1x128xf32> to vector<32x128xf32>
    %141 = arith.mulf %139, %140 : vector<32x128xf32>
    %142 = vector.broadcast %130 : vector<32x1xf32> to vector<32x128xf32>
    %143 = arith.mulf %142, %141 : vector<32x128xf32>
    %144 = vector.broadcast %8 : vector<1x128xf32> to vector<32x128xf32>
    %145 = arith.subf %144, %143 : vector<32x128xf32>
    %146 = arith.mulf %121, %141 : vector<32x128xf32>
    %147 = arith.addf %146, %145 : vector<32x128xf32>
    %cst_49 = arith.constant 0.000000e+00 : f32
    %148 = vector.broadcast %cst_49 : f32 to vector<32x128xf32>
    %149 = arith.maximumf %147, %148 : vector<32x128xf32>
    %150 = arith.addf %1, %149 : vector<32x128xf32>
    %cst_50 = arith.constant 0.000000e+00 : f32
    %151 = vector.broadcast %cst_50 : f32 to vector<32x128xf32>
    %152 = arith.maximumf %150, %151 : vector<32x128xf32>
    %c0_51 = arith.constant 0 : index
    %c0_52 = arith.constant 0 : index
    %c0_53 = arith.constant 0 : index
    %153 = vector.load %arg6[%c0_51, %c0_52, %c0_53] : memref<1x32x128xf32, #tpu.memory_space<vmem>>, vector<1x32x128xf32>
    %154 = vector.shape_cast %153 : vector<1x32x128xf32> to vector<32x128xf32>
    %155 = vector.shape_cast %152 : vector<32x128xf32> to vector<1x32x128xf32>
    tpu.vector_store %arg6[%c0_51, %c0_52, %c0_53], %155 {strides = array<i32>} : memref<1x32x128xf32, #tpu.memory_space<vmem>>, vector<1x32x128xf32>,
    return
  }
  func.func @transform_0(%arg0: i32) -> (i32, i32, i32) {
    %c0_i32 = arith.constant 0 : i32
    %c0_i32_0 = arith.constant 0 : i32
    %c0_i32_1 = arith.constant 0 : i32
    return %arg0, %c0_i32, %c0_i32_0 : i32, i32, i32
  }
  func.func @transform_1(%arg0: i32) -> (i32, i32) {
    %c0_i32 = arith.constant 0 : i32
    %c0_i32_0 = arith.constant 0 : i32
    %c0_i32_1 = arith.constant 0 : i32
    return %c0_i32, %c0_i32_0 : i32, i32
  }
  func.func @transform_2(%arg0: i32) -> (i32, i32) {
    %c0_i32 = arith.constant 0 : i32
    %c0_i32_0 = arith.constant 0 : i32
    %c0_i32_1 = arith.constant 0 : i32
    return %c0_i32, %c0_i32_0 : i32, i32
  }
  func.func @transform_3(%arg0: i32) -> (i32, i32) {
    %c0_i32 = arith.constant 0 : i32
    %c0_i32_0 = arith.constant 0 : i32
    %c0_i32_1 = arith.constant 0 : i32
    return %c0_i32, %c0_i32_0 : i32, i32
  }
  func.func @transform_4(%arg0: i32) -> (i32, i32) {
    %c0_i32 = arith.constant 0 : i32
    %c0_i32_0 = arith.constant 0 : i32
    %c0_i32_1 = arith.constant 0 : i32
    return %c0_i32, %c0_i32_0 : i32, i32
  }
  func.func @transform_5(%arg0: i32) -> (i32, i32, i32) {
    %c0_i32 = arith.constant 0 : i32
    %c0_i32_0 = arith.constant 0 : i32
    %c0_i32_1 = arith.constant 0 : i32
    return %arg0, %c0_i32, %c0_i32_0 : i32, i32, i32
  }
}

</mosaic_0001>

<llo_original>
// kernel: residual_block_pallas.1
$region0: #{residual_block_pallas.1}
  #allocation0 [shape = 'u32[]', space=smem, size = 0x4, offset = 0x4, fixed_abs, tag = 'smem constant byte address 0x4 - core index']
  #allocation1 [shape = 'u32[144,128]{1,0:T(1,128)}', space=vmem, size = 0x12000, scoped, tag = 'internal scratch']
  %s0 = inlined_call_operand.vmem [shape: f32[1,32,128], index: 0, kind: input, shape index: {}]
  %s1 = inlined_call_operand.vmem [shape: bf16[384,128], index: 1, kind: input, shape index: {}]
  %s2 = inlined_call_operand.vmem [shape: bf16[384,128], index: 2, kind: input, shape index: {}]
  %s3 = inlined_call_operand.vmem [shape: f32[8,128], index: 3, kind: input, shape index: {}]
  %s4 = inlined_call_operand.vmem [shape: f32[64,64], index: 4, kind: input, shape index: {}]
  %s5 = inlined_call_operand.vmem [shape: f32[1,32,128], index: 5, kind: output, shape index: {}]
  %s6 = sld [smem:[#allocation0]]
  $region30: #{residual_block_pallas.1} parent=0
    _
  %s8 = ssub.s32 1, %s6
  %s9 = scalar_select 0, %s8, %s6
  // Predicated region
  $region2: #{residual_block_pallas.1} parent=0 // pred_check
    _
  $region3: #{residual_block_pallas.1} parent=0 // pred_check_branch
    %11 = sbr.rel (0) target = $region5
  $region4: #{residual_block_pallas.1} parent=0 // pred_region
    _
  $region5: #{residual_block_pallas.1} parent=0 // pred_fallthru
    _
  // Predicated region
  $region6: #{residual_block_pallas.1} parent=0 // pred_check
    _
  $region7: #{residual_block_pallas.1} parent=0 // pred_check_branch
    %13 = sbr.rel (0) target = $region9
  $region8: #{residual_block_pallas.1} parent=0 // pred_region
    _
  $region9: #{residual_block_pallas.1} parent=0 // pred_fallthru
    _
  // Predicated region
  $region10: #{residual_block_pallas.1} parent=0 // pred_check
    _
  $region11: #{residual_block_pallas.1} parent=0 // pred_check_branch
    %15 = sbr.rel (0) target = $region13
  $region12: #{residual_block_pallas.1} parent=0 // pred_region
    _
  $region13: #{residual_block_pallas.1} parent=0 // pred_fallthru
    _
  // Predicated region
  $region14: #{residual_block_pallas.1} parent=0 // pred_check
    _
  $region15: #{residual_block_pallas.1} parent=0 // pred_check_branch
    %17 = sbr.rel (0) target = $region17
  $region16: #{residual_block_pallas.1} parent=0 // pred_region
    _
  $region17: #{residual_block_pallas.1} parent=0 // pred_fallthru
    _
  // Predicated region
  $region18: #{residual_block_pallas.1} parent=0 // pred_check
    _
  $region19: #{residual_block_pallas.1} parent=0 // pred_check_branch
    %19 = sbr.rel (0) target = $region21
  $region20: #{residual_block_pallas.1} parent=0 // pred_region
    _
  $region21: #{residual_block_pallas.1} parent=0 // pred_fallthru
    _
  %v21 = vld [vmem:[%s0] sm:$0xff]
  %v22 = vld [vmem:[%s0 + $0x8] sm:$0xff]
  %v23 = vld [vmem:[%s0 + $0x10] sm:$0xff]
  %v24 = vld [vmem:[%s0 + $0x18] sm:$0xff]
  %v25 = vld [vmem:[%s3] sm:$0xff]
  %v26 = vlaneseq
  %v27 = vshrl.u32 %v26, 7
  %v28 = vadd.s32 %v27, 8
  %v29 = vadd.s32 %v27, 16
  %v30 = vadd.s32 %v27, 24
  %vm31 = vcmp.lt.s32.totalorder %v27, 0
  %v32 = vsub.s32 0, %v27
  %v33 = vsel %vm31, %v32, %v27
  %v34 = vshrl.u32 %v33, 4
  %v35 = vand.u32 %v33, 15
  %v36 = vsub.s32 0, %v35
  %v37 = vsel %vm31, %v36, %v35
  %vm38 = vcmp.lt.s32.totalorder %v28, 0
  %v39 = vsub.s32 0, %v28
  %v40 = vsel %vm38, %v39, %v28
  %v41 = vshrl.u32 %v40, 4
  %v42 = vand.u32 %v40, 15
  %v43 = vsub.s32 0, %v42
  %v44 = vsel %vm38, %v43, %v42
  %vm45 = vcmp.lt.s32.totalorder %v29, 0
  %v46 = vsub.s32 0, %v29
  %v47 = vsel %vm45, %v46, %v29
  %v48 = vshrl.u32 %v47, 4
  %v49 = vand.u32 %v47, 15
  %v50 = vsub.s32 0, %v49
  %v51 = vsel %vm45, %v50, %v49
  %vm52 = vcmp.lt.s32.totalorder %v30, 0
  %v53 = vsub.s32 0, %v30
  %v54 = vsel %vm52, %v53, %v30
  %v55 = vshrl.u32 %v54, 4
  %v56 = vand.u32 %v54, 15
  %v57 = vsub.s32 0, %v56
  %v58 = vsel %vm52, %v57, %v56
  %vm59 = vcmp.ne.s32.totalorder %v37, 0
  %vm60 = vcmp.ne.s32.totalorder %v44, 0
  %vm61 = vcmp.ne.s32.totalorder %v51, 0
  %vm62 = vcmp.ne.s32.totalorder %v58, 0
  %vm63 = vcmp.lt.s32.totalorder %v37, 0
  %vm64 = vcmp.lt.s32.totalorder %v44, 0
  %vm65 = vcmp.lt.s32.totalorder %v51, 0
  %vm66 = vcmp.lt.s32.totalorder %v58, 0
  %vm67 = vmand %vm63, %vm59
  %vm68 = vmand %vm64, %vm60
  %vm69 = vmand %vm65, %vm61
  %vm70 = vmand %vm66, %vm62
  %v71 = vadd.s32 %v37, 16
  %v72 = vadd.s32 %v44, 16
  %v73 = vadd.s32 %v51, 16
  %v74 = vadd.s32 %v58, 16
  %v75 = vsel %vm67, %v71, %v37
  %v76 = vsel %vm68, %v72, %v44
  %v77 = vsel %vm69, %v73, %v51
  %v78 = vsel %vm70, %v74, %v58
  %v79 = vrot.slane %v21, 7
  %v80 = vrot.slane %v22, 7
  %v81 = vrot.slane %v23, 7
  %v82 = vrot.slane %v24, 7
  %vm83 = vcmp.lt.s32.totalorder %v27, 1
  %v84 = vsel %vm83, %v81, %v82
  %v85 = vsel %vm83, %v80, %v81
  %v86 = vsel %vm83, %v79, %v80
  %v87 = vsel %vm83, %v82, %v79
  %v88 = vadd.s32 %v75, 4294967295
  %v89 = vadd.s32 %v76, 4294967295
  %v90 = vadd.s32 %v77, 4294967295
  %v91 = vadd.s32 %v78, 4294967295
  %vm92 = vcmp.ge.s32.totalorder %v88, 0
  %vm93 = vcmp.ge.s32.totalorder %v89, 0
  %vm94 = vcmp.ge.s32.totalorder %v90, 0
  %vm95 = vcmp.ge.s32.totalorder %v91, 0
  %vm96 = vcmp.lt.s32.totalorder %v88, 16
  %vm97 = vcmp.lt.s32.totalorder %v89, 16
  %vm98 = vcmp.lt.s32.totalorder %v90, 16
  %vm99 = vcmp.lt.s32.totalorder %v91, 16
  %vm100 = vmand %vm92, %vm96
  %vm101 = vmand %vm93, %vm97
  %vm102 = vmand %vm94, %vm98
  %vm103 = vmand %vm95, %vm99
  %v104 = vsel %vm100, 1, 0
  %v105 = vsel %vm101, 1, 0
  %v106 = vsel %vm102, 1, 0
  %v107 = vsel %vm103, 1, 0
  %vm108 = vcmp.eq.s32.totalorder %v104, 1
  %vm109 = vcmp.eq.s32.totalorder %v105, 1
  %vm110 = vcmp.eq.s32.totalorder %v106, 1
  %vm111 = vcmp.eq.s32.totalorder %v107, 1
  %v112 = vsel %vm108, %v87, 0.0
  %v113 = vsel %vm109, %v86, 0.0
  %v114 = vsel %vm110, %v85, 0.0
  %v115 = vsel %vm111, %v84, 0.0
  %v116 = vrot.slane %v21, 1
  %v117 = vrot.slane %v22, 1
  %v118 = vrot.slane %v23, 1
  %v119 = vrot.slane %v24, 1
  %vm120 = vcmp.lt.s32.totalorder %v27, 7
  %v121 = vsel %vm120, %v118, %v119
  %v122 = vsel %vm120, %v117, %v118
  %v123 = vsel %vm120, %v116, %v117
  %v124 = vsel %vm120, %v119, %v116
  %v125 = vadd.s32 %v75, 1
  %v126 = vadd.s32 %v76, 1
  %v127 = vadd.s32 %v77, 1
  %v128 = vadd.s32 %v78, 1
  %vm129 = vcmp.ge.s32.totalorder %v125, 0
  %vm130 = vcmp.ge.s32.totalorder %v126, 0
  %vm131 = vcmp.ge.s32.totalorder %v127, 0
  %vm132 = vcmp.ge.s32.totalorder %v128, 0
  %vm133 = vcmp.lt.s32.totalorder %v125, 16
  %vm134 = vcmp.lt.s32.totalorder %v126, 16
  %vm135 = vcmp.lt.s32.totalorder %v127, 16
  %vm136 = vcmp.lt.s32.totalorder %v128, 16
  %vm137 = vmand %vm129, %vm133
  %vm138 = vmand %vm130, %vm134
  %vm139 = vmand %vm131, %vm135
  %vm140 = vmand %vm132, %vm136
  %v141 = vsel %vm137, 1, 0
  %v142 = vsel %vm138, 1, 0
  %v143 = vsel %vm139, 1, 0
  %v144 = vsel %vm140, 1, 0
  %vm145 = vcmp.eq.s32.totalorder %v141, 1
  %vm146 = vcmp.eq.s32.totalorder %v142, 1
  %vm147 = vcmp.eq.s32.totalorder %v143, 1
  %vm148 = vcmp.eq.s32.totalorder %v144, 1
  %v149 = vsel %vm145, %v123, 0.0
  %v150 = vsel %vm146, %v122, 0.0
  %v151 = vsel %vm147, %v121, 0.0
  %v152 = vsel %vm148, %v124, 0.0
  %v153 = vpack.c.bf16 %v113, %v112
  %v154 = vpack.c.bf16 %v22, %v21
  %v155 = vpack.c.bf16 %v150, %v149
  %v156 = vpack.c.bf16 %v115, %v114
  %v157 = vpack.c.bf16 %v24, %v23
  %v158 = vpack.c.bf16 %v152, %v151
  %v159 = vld [vmem:[%s1] sm:$0xf]
  %v160 = vld [vmem:[%s1 + $0x4] sm:$0xf]
  %v161 = vld [vmem:[%s1 + $0x8] sm:$0xf]
  %v162 = vld [vmem:[%s1 + $0xc] sm:$0xf]
  %v163 = vld [vmem:[%s1 + $0x10] sm:$0xf]
  %v164 = vld [vmem:[%s1 + $0x14] sm:$0xf]
  %v165 = vld [vmem:[%s1 + $0x18] sm:$0xf]
  %v166 = vld [vmem:[%s1 + $0x1c] sm:$0xf]
  %v167 = vld [vmem:[%s1 + $0x20] sm:$0xf]
  %v168 = vld [vmem:[%s1 + $0x24] sm:$0xf]
  %v169 = vld [vmem:[%s1 + $0x28] sm:$0xf]
  %v170 = vld [vmem:[%s1 + $0x2c] sm:$0xf]
  %v171 = vld [vmem:[%s1 + $0x30] sm:$0xf]
  %v172 = vld [vmem:[%s1 + $0x34] sm:$0xf]
  %v173 = vld [vmem:[%s1 + $0x38] sm:$0xf]
  %v174 = vld [vmem:[%s1 + $0x3c] sm:$0xf]
  %v175 = vld [vmem:[%s1 + $0x40] sm:$0xf]
  %v176 = vld [vmem:[%s1 + $0x44] sm:$0xf]
  %v177 = vld [vmem:[%s1 + $0x48] sm:$0xf]
  %v178 = vld [vmem:[%s1 + $0x4c] sm:$0xf]
  %v179 = vld [vmem:[%s1 + $0x50] sm:$0xf]
  %v180 = vld [vmem:[%s1 + $0x54] sm:$0xf]
  %v181 = vld [vmem:[%s1 + $0x58] sm:$0xf]
  %v182 = vld [vmem:[%s1 + $0x5c] sm:$0xf]
  %v183 = vld [vmem:[%s1 + $0x60] sm:$0xf]
  %v184 = vld [vmem:[%s1 + $0x64] sm:$0xf]
  %v185 = vld [vmem:[%s1 + $0x68] sm:$0xf]
  %v186 = vld [vmem:[%s1 + $0x6c] sm:$0xf]
  %v187 = vld [vmem:[%s1 + $0x70] sm:$0xf]
  %v188 = vld [vmem:[%s1 + $0x74] sm:$0xf]
  %v189 = vld [vmem:[%s1 + $0x78] sm:$0xf]
  %v190 = vld [vmem:[%s1 + $0x7c] sm:$0xf]
  %v191 = vld [vmem:[%s1 + $0x80] sm:$0xf]
  %v192 = vld [vmem:[%s1 + $0x84] sm:$0xf]
  %v193 = vld [vmem:[%s1 + $0x88] sm:$0xf]
  %v194 = vld [vmem:[%s1 + $0x8c] sm:$0xf]
  %v195 = vld [vmem:[%s1 + $0x90] sm:$0xf]
  %v196 = vld [vmem:[%s1 + $0x94] sm:$0xf]
  %v197 = vld [vmem:[%s1 + $0x98] sm:$0xf]
  %v198 = vld [vmem:[%s1 + $0x9c] sm:$0xf]
  %v199 = vld [vmem:[%s1 + $0xa0] sm:$0xf]
  %v200 = vld [vmem:[%s1 + $0xa4] sm:$0xf]
  %v201 = vld [vmem:[%s1 + $0xa8] sm:$0xf]
  %v202 = vld [vmem:[%s1 + $0xac] sm:$0xf]
  %v203 = vld [vmem:[%s1 + $0xb0] sm:$0xf]
  %v204 = vld [vmem:[%s1 + $0xb4] sm:$0xf]
  %v205 = vld [vmem:[%s1 + $0xb8] sm:$0xf]
  %v206 = vld [vmem:[%s1 + $0xbc] sm:$0xf]
  %v207 = vlaneseq
  %v208 = vshrl.u32 %v207, 7
  %v209 = vsub.s32 0, %v208
  %v210 = vrot.slane %v25, %v209
  %v259 = vunpack.c.l.b16 %v159
  %v260 = vunpack.c.l.b16 %v160
  %v261 = vunpack.c.l.b16 %v161
  %v262 = vunpack.c.l.b16 %v162
  %v263 = vunpack.c.l.b16 %v163
  %v264 = vunpack.c.l.b16 %v164
  %v265 = vunpack.c.l.b16 %v165
  %v266 = vunpack.c.l.b16 %v166
  %v267 = vunpack.c.l.b16 %v167
  %v268 = vunpack.c.l.b16 %v168
  %v269 = vunpack.c.l.b16 %v169
  %v270 = vunpack.c.l.b16 %v170
  %v271 = vunpack.c.l.b16 %v171
  %v272 = vunpack.c.l.b16 %v172
  %v273 = vunpack.c.l.b16 %v173
  %v274 = vunpack.c.l.b16 %v174
  %v275 = vunpack.c.l.b16 %v175
  %v276 = vunpack.c.l.b16 %v176
  %v277 = vunpack.c.l.b16 %v177
  %v278 = vunpack.c.l.b16 %v178
  %v279 = vunpack.c.l.b16 %v179
  %v280 = vunpack.c.l.b16 %v180
  %v281 = vunpack.c.l.b16 %v181
  %v282 = vunpack.c.l.b16 %v182
  %v283 = vunpack.c.l.b16 %v183
  %v284 = vunpack.c.l.b16 %v184
  %v285 = vunpack.c.l.b16 %v185
  %v286 = vunpack.c.l.b16 %v186
  %v287 = vunpack.c.l.b16 %v187
  %v288 = vunpack.c.l.b16 %v188
  %v289 = vunpack.c.l.b16 %v189
  %v290 = vunpack.c.l.b16 %v190
  %v291 = vunpack.c.l.b16 %v191
  %v292 = vunpack.c.l.b16 %v192
  %v293 = vunpack.c.l.b16 %v193
  %v294 = vunpack.c.l.b16 %v194
  %v295 = vunpack.c.l.b16 %v195
  %v296 = vunpack.c.l.b16 %v196
  %v297 = vunpack.c.l.b16 %v197
  %v298 = vunpack.c.l.b16 %v198
  %v299 = vunpack.c.l.b16 %v199
  %v300 = vunpack.c.l.b16 %v200
  %v301 = vunpack.c.l.b16 %v201
  %v302 = vunpack.c.l.b16 %v202
  %v303 = vunpack.c.l.b16 %v203
  %v304 = vunpack.c.l.b16 %v204
  %v305 = vunpack.c.l.b16 %v205
  %v306 = vunpack.c.l.b16 %v206
  %v307 = vpack.c.b16 %v260, %v259
  %v308 = vpack.c.b16 %v262, %v261
  %v309 = vpack.c.b16 %v264, %v263
  %v310 = vpack.c.b16 %v266, %v265
  %v311 = vpack.c.b16 %v268, %v267
  %v312 = vpack.c.b16 %v270, %v269
  %v313 = vpack.c.b16 %v272, %v271
  %v314 = vpack.c.b16 %v274, %v273
  %v315 = vpack.c.b16 %v276, %v275
  %v316 = vpack.c.b16 %v278, %v277
  %v317 = vpack.c.b16 %v280, %v279
  %v318 = vpack.c.b16 %v282, %v281
  %v319 = vpack.c.b16 %v284, %v283
  %v320 = vpack.c.b16 %v286, %v285
  %v321 = vpack.c.b16 %v288, %v287
  %v322 = vpack.c.b16 %v290, %v289
  %v323 = vpack.c.b16 %v292, %v291
  %v324 = vpack.c.b16 %v294, %v293
  %v325 = vpack.c.b16 %v296, %v295
  %v326 = vpack.c.b16 %v298, %v297
  %v327 = vpack.c.b16 %v300, %v299
  %v328 = vpack.c.b16 %v302, %v301
  %v329 = vpack.c.b16 %v304, %v303
  %v330 = vpack.c.b16 %v306, %v305
  %355 = vmatprep.subr.bf16.mxu0 0
  %356 = vmatpush1.bf16.msra.mxu0 %v307
  %357 = vmatprep.subr.bf16.mxu0 0
  %358 = vmatpush1.bf16.msra.mxu0 %v308
  %359 = vmatprep.subr.bf16.mxu0 0
  %360 = vmatpush1.bf16.msra.mxu0 %v309
  %361 = vmatprep.subr.bf16.mxu0 0
  %362 = vmatpush1.bf16.msra.mxu0 %v310
  %363 = vmatprep.subr.bf16.mxu0 0
  %364 = vmatpush1.bf16.msra.mxu0 %v311
  %365 = vmatprep.subr.bf16.mxu0 0
  %366 = vmatpush1.bf16.msra.mxu0 %v312
  %367 = vmatprep.subr.bf16.mxu0 0
  %368 = vmatpush1.bf16.msra.mxu0 %v313
  %369 = vmatprep.subr.bf16.mxu0 0
  %370 = vmatpush1.bf16.msra.mxu0 %v314
  %371 = vmatprep.subr.bf16.mxu0 0
  %372 = vmatpush1.bf16.msra.mxu0 %v315
  %373 = vmatprep.subr.bf16.mxu0 0
  %374 = vmatpush1.bf16.msra.mxu0 %v316
  %375 = vmatprep.subr.bf16.mxu0 0
  %376 = vmatpush1.bf16.msra.mxu0 %v317
  %377 = vmatprep.subr.bf16.mxu0 0
  %378 = vmatpush1.bf16.msra.mxu0 %v318
  %379 = vmatprep.subr.bf16.mxu0 0
  %380 = vmatpush1.bf16.msra.mxu0 %v319
  %381 = vmatprep.subr.bf16.mxu0 0
  %382 = vmatpush1.bf16.msra.mxu0 %v320
  %383 = vmatprep.subr.bf16.mxu0 0
  %384 = vmatpush1.bf16.msra.mxu0 %v321
  %385 = vmatprep.subr.bf16.mxu0 0
  %386 = vmatpush1.bf16.msra.mxu0 %v322
  %387 = vmatprep.mubr.bf16.mxu0 %v154
  %388 = vmatmul.mubr.bf16.gmra.mrb[0].mxu0 %v153
  %v389 = vpop.f32.mrb[0].mxu0
  %v390 = vadd.f32 %v210, %v389
  %v391 = vpop.f32.mrb[0].mxu0
  %v392 = vpop.f32.mrb[0].mxu0
  %v393 = vadd.f32 %v210, %v392
  %v394 = vpop.f32.mrb[0].mxu0
  %395 = vmatprep.mubr.bf16.mxu0 %v157
  %396 = vmatmul.mubr.bf16.gmra.mrb[0].mxu0 %v156
  %v397 = vpop.f32.mrb[0].mxu0
  %v398 = vadd.f32 %v210, %v397
  %v399 = vpop.f32.mrb[0].mxu0
  %v400 = vpop.f32.mrb[0].mxu0
  %v401 = vadd.f32 %v210, %v400
  %v402 = vpop.f32.mrb[0].mxu0
  %403 = vdwg.mxu0
  %404 = vmatprep.subr.bf16.mxu0 0
  %405 = vmatpush1.bf16.msra.mxu0 %v323
  %406 = vmatprep.subr.bf16.mxu0 0
  %407 = vmatpush1.bf16.msra.mxu0 %v324
  %408 = vmatprep.subr.bf16.mxu0 0
  %409 = vmatpush1.bf16.msra.mxu0 %v325
  %410 = vmatprep.subr.bf16.mxu0 0
  %411 = vmatpush1.bf16.msra.mxu0 %v326
  %412 = vmatprep.subr.bf16.mxu0 0
  %413 = vmatpush1.bf16.msra.mxu0 %v327
  %414 = vmatprep.subr.bf16.mxu0 0
  %415 = vmatpush1.bf16.msra.mxu0 %v328
  %416 = vmatprep.subr.bf16.mxu0 0
  %417 = vmatpush1.bf16.msra.mxu0 %v329
  %418 = vmatprep.subr.bf16.mxu0 0
  %419 = vmatpush1.bf16.msra.mxu0 %v330
  %420 = vmatprep.subr.bf16.mxu0 0
  %421 = vmatpush1.bf16.msra.mxu0 0
  %422 = vmatprep.subr.bf16.mxu0 0
  %423 = vmatpush1.bf16.msra.mxu0 0
  %424 = vmatprep.subr.bf16.mxu0 0
  %425 = vmatpush1.bf16.msra.mxu0 0
  %426 = vmatprep.subr.bf16.mxu0 0
  %427 = vmatpush1.bf16.msra.mxu0 0
  %428 = vmatprep.subr.bf16.mxu0 0
  %429 = vmatpush1.bf16.msra.mxu0 0
  %430 = vmatprep.subr.bf16.mxu0 0
  %431 = vmatpush1.bf16.msra.mxu0 0
  %432 = vmatprep.subr.bf16.mxu0 0
  %433 = vmatpush1.bf16.msra.mxu0 0
  %434 = vmatprep.subr.bf16.mxu0 0
  %435 = vmatpush1.bf16.msra.mxu0 0
  %436 = vmatprep.mubr.bf16.mxu0 0
  %437 = vmatmul.mubr.bf16.gmra.mrb[0].mxu0 %v155
  %v438 = vpop.f32.mrb[0].mxu0
  %v439 = vadd.f32 %v390, %v438
  %v440 = vpop.f32.mrb[0].mxu0
  %v441 = vpop.f32.mrb[0].mxu0
  %v442 = vadd.f32 %v393, %v441
  %v443 = vpop.f32.mrb[0].mxu0
  %444 = vmatprep.mubr.bf16.mxu0 0
  %445 = vmatmul.mubr.bf16.gmra.mrb[0].mxu0 %v158
  %v446 = vpop.f32.mrb[0].mxu0
  %v447 = vadd.f32 %v398, %v446
  %v448 = vpop.f32.mrb[0].mxu0
  %v449 = vpop.f32.mrb[0].mxu0
  %v450 = vadd.f32 %v401, %v449
  %v451 = vpop.f32.mrb[0].mxu0
  %452 = vdwg.mxu0
  %v453 = vmul.f32 %v439, %v439
  %v454 = vmul.f32 %v442, %v442
  %v455 = vmul.f32 %v447, %v447
  %v456 = vmul.f32 %v450, %v450
  %v457 = vld [vmem:[%s4] sm:$0xff]
  %v458 = vld [vmem:[%s4 + $0x8] sm:$0xff]
  %v459 = vld [vmem:[%s4 + $0x10] sm:$0xff]
  %v460 = vld [vmem:[%s4 + $0x18] sm:$0xff]
  %v461 = vld [vmem:[%s4 + $0x20] sm:$0xff]
  %v462 = vld [vmem:[%s4 + $0x28] sm:$0xff]
  %v463 = vld [vmem:[%s4 + $0x30] sm:$0xff]
  %v464 = vld [vmem:[%s4 + $0x38] sm:$0xff]
  %vm465 = vcmask 523264
  %v467 = vsel %vm465, %v457, 0
  %v470 = vsel %vm465, %v458, 0
  %v473 = vsel %vm465, %v459, 0
  %v476 = vsel %vm465, %v460, 0
  %v479 = vsel %vm465, %v461, 0
  %v482 = vsel %vm465, %v462, 0
  %v485 = vsel %vm465, %v463, 0
  %v488 = vsel %vm465, %v464, 0
  %490 = vmatprep.subr.mxu0 0.0
  %491 = vmatpush1.msra.mxu0 %v439
  %492 = vmatprep.subr.mxu0 0.0
  %493 = vmatpush1.msra.mxu0 %v442
  %494 = vmatprep.subr.mxu0 0.0
  %495 = vmatpush1.msra.mxu0 %v447
  %496 = vmatprep.subr.mxu0 0.0
  %497 = vmatpush1.msra.mxu0 %v450
  %498 = vmatprep.subr.mxu0 0.0
  %499 = vmatpush1.msra.mxu0 %v453
  %500 = vmatprep.subr.mxu0 0.0
  %501 = vmatpush1.msra.mxu0 %v454
  %502 = vmatprep.subr.mxu0 0.0
  %503 = vmatpush1.msra.mxu0 %v455
  %504 = vmatprep.subr.mxu0 0.0
  %505 = vmatpush1.msra.mxu0 %v456
  %506 = vmatprep.subr.mxu0 0.0
  %507 = vmatpush1.msra.mxu0 0.0
  %508 = vmatprep.subr.mxu0 0.0
  %509 = vmatpush1.msra.mxu0 0.0
  %510 = vmatprep.subr.mxu0 0.0
  %511 = vmatpush1.msra.mxu0 0.0
  %512 = vmatprep.subr.mxu0 0.0
  %513 = vmatpush1.msra.mxu0 0.0
  %514 = vmatprep.subr.mxu0 0.0
  %515 = vmatpush1.msra.mxu0 0.0
  %516 = vmatprep.subr.mxu0 0.0
  %517 = vmatpush1.msra.mxu0 0.0
  %518 = vmatprep.subr.mxu0 0.0
  %519 = vmatpush1.msra.mxu0 0.0
  %520 = vmatprep.subr.mxu0 0.0
  %521 = vmatpush1.msra.mxu0 0.0
  %522 = vmatprep.subr.mxu0 0.0
  %523 = vmatpush1.msra.mxu0 0.0
  %524 = vmatprep.subr.mxu0 0.0
  %525 = vmatpush1.msra.mxu0 0.0
  %526 = vmatprep.subr.mxu0 0.0
  %527 = vmatpush1.msra.mxu0 0.0
  %528 = vmatprep.subr.mxu0 0.0
  %529 = vmatpush1.msra.mxu0 0.0
  %530 = vmatprep.subr.mxu0 0.0
  %531 = vmatpush1.msra.mxu0 0.0
  %532 = vmatprep.subr.mxu0 0.0
  %533 = vmatpush1.msra.mxu0 0.0
  %534 = vmatprep.subr.mxu0 0.0
  %535 = vmatpush1.msra.mxu0 0.0
  %536 = vmatprep.subr.mxu0 0.0
  %537 = vmatpush1.msra.mxu0 0.0
  %538 = vmatprep.subr.mxu0 0.0
  %539 = vmatpush1.msra.mxu0 0.0
  %540 = vmatprep.subr.mxu0 0.0
  %541 = vmatpush1.msra.mxu0 0.0
  %542 = vmatprep.subr.mxu0 0.0
  %543 = vmatpush1.msra.mxu0 0.0
  %544 = vmatprep.subr.mxu0 0.0
  %545 = vmatpush1.msra.mxu0 0.0
  %546 = vmatprep.subr.mxu0 0.0
  %547 = vmatpush1.msra.mxu0 0.0
  %548 = vmatprep.subr.mxu0 0.0
  %549 = vmatpush1.msra.mxu0 0.0
  %550 = vmatprep.subr.mxu0 0.0
  %551 = vmatpush1.msra.mxu0 0.0
  %552 = vmatprep.subr.mxu0 0.0
  %553 = vmatpush1.msra.mxu0 0.0
  %554 = vmatprep.mubr.f32.mxu0 0.0
  %555 = vmatmul.mubr.f32.gmra.mrb[0].mxu0 %v467
  %v556 = vpop.f32.mrb[0].mxu0
  %v557 = vadd.f32 0.0, %v556
  %v558 = vpop.f32.mrb[0].mxu0
  %559 = vmatprep.mubr.f32.mxu0 0.0
  %560 = vmatmul.mubr.f32.gmra.mrb[0].mxu0 %v470
  %v561 = vpop.f32.mrb[0].mxu0
  %v562 = vadd.f32 0.0, %v561
  %v563 = vpop.f32.mrb[0].mxu0
  %564 = vmatprep.mubr.f32.mxu0 0.0
  %565 = vmatmul.mubr.f32.gmra.mrb[0].mxu0 %v473
  %v566 = vpop.f32.mrb[0].mxu0
  %v567 = vadd.f32 0.0, %v566
  %v568 = vpop.f32.mrb[0].mxu0
  %569 = vmatprep.mubr.f32.mxu0 0.0
  %570 = vmatmul.mubr.f32.gmra.mrb[0].mxu0 %v476
  %v571 = vpop.f32.mrb[0].mxu0
  %v572 = vadd.f32 0.0, %v571
  %v573 = vpop.f32.mrb[0].mxu0
  %574 = vmatprep.mubr.f32.mxu0 0.0
  %575 = vmatmul.mubr.f32.gmra.mrb[0].mxu0 %v479
  %v576 = vpop.f32.mrb[0].mxu0
  %v577 = vadd.f32 0.0, %v576
  %v578 = vpop.f32.mrb[0].mxu0
  %579 = vmatprep.mubr.f32.mxu0 0.0
  %580 = vmatmul.mubr.f32.gmra.mrb[0].mxu0 %v482
  %v581 = vpop.f32.mrb[0].mxu0
  %v582 = vadd.f32 0.0, %v581
  %v583 = vpop.f32.mrb[0].mxu0
  %584 = vmatprep.mubr.f32.mxu0 0.0
  %585 = vmatmul.mubr.f32.gmra.mrb[0].mxu0 %v485
  %v586 = vpop.f32.mrb[0].mxu0
  %v587 = vadd.f32 0.0, %v586
  %v588 = vpop.f32.mrb[0].mxu0
  %589 = vmatprep.mubr.f32.mxu0 0.0
  %590 = vmatmul.mubr.f32.gmra.mrb[0].mxu0 %v488
  %v591 = vpop.f32.mrb[0].mxu0
  %v592 = vadd.f32 0.0, %v591
  %v593 = vpop.f32.mrb[0].mxu0
  %594 = vdwg.mxu0
  %595 = vadd.xlane.f32.xlu0 %v557
  %v596 = vpop.xlane.xlu0 %595
  %597 = vadd.xlane.f32.xlu0 %v562
  %v598 = vpop.xlane.xlu0 %597
  %599 = vadd.xlane.f32.xlu0 %v567
  %v600 = vpop.xlane.xlu0 %599
  %601 = vadd.xlane.f32.xlu0 %v572
  %v602 = vpop.xlane.xlu0 %601
  %603 = vadd.xlane.f32.xlu0 %v577
  %v604 = vpop.xlane.xlu0 %603
  %605 = vadd.xlane.f32.xlu0 %v582
  %v606 = vpop.xlane.xlu0 %605
  %607 = vadd.xlane.f32.xlu0 %v587
  %v608 = vpop.xlane.xlu0 %607
  %609 = vadd.xlane.f32.xlu0 %v592
  %v610 = vpop.xlane.xlu0 %609
  %v611 = vmul.f32 %v596, 0.00048828125
  %v612 = vmul.f32 %v598, 0.00048828125
  %v613 = vmul.f32 %v600, 0.00048828125
  %v614 = vmul.f32 %v602, 0.00048828125
  %v615 = vmul.f32 %v604, 0.00048828125
  %v616 = vmul.f32 %v606, 0.00048828125
  %v617 = vmul.f32 %v608, 0.00048828125
  %v618 = vmul.f32 %v610, 0.00048828125
  %v619 = vmul.f32 %v611, %v611
  %v620 = vmul.f32 %v612, %v612
  %v621 = vmul.f32 %v613, %v613
  %v622 = vmul.f32 %v614, %v614
  %v623 = vsub.f32 %v615, %v619
  %v624 = vsub.f32 %v616, %v620
  %v625 = vsub.f32 %v617, %v621
  %v626 = vsub.f32 %v618, %v622
  %v627 = vmax.f32 %v623, 0.0
  %v628 = vmax.f32 %v624, 0.0
  %v629 = vmax.f32 %v625, 0.0
  %v630 = vmax.f32 %v626, 0.0
  %v631 = vadd.f32 %v627, 1e-05
  %v632 = vadd.f32 %v628, 1e-05
  %v633 = vadd.f32 %v629, 1e-05
  %v634 = vadd.f32 %v630, 1e-05
  %v635 = vrsqrt.pop %v631
  %v636 = vrsqrt.pop %v632
  %v637 = vrsqrt.pop %v633
  %v638 = vrsqrt.pop %v634
  %v639 = vlaneseq
  %v640 = vshrl.u32 %v639, 7
  %v641 = vsub.s32 1, %v640
  %v642 = vrot.slane %v25, %v641
  %v643 = vmul.f32 %v635, %v642
  %v644 = vmul.f32 %v636, %v642
  %v645 = vmul.f32 %v637, %v642
  %v646 = vmul.f32 %v638, %v642
  %v647 = vmul.f32 %v611, %v643
  %v648 = vmul.f32 %v612, %v644
  %v649 = vmul.f32 %v613, %v645
  %v650 = vmul.f32 %v614, %v646
  %v651 = vlaneseq
  %v652 = vshrl.u32 %v651, 7
  %v653 = vsub.s32 2, %v652
  %v654 = vrot.slane %v25, %v653
  %v655 = vsub.f32 %v654, %v647
  %v656 = vsub.f32 %v654, %v648
  %v657 = vsub.f32 %v654, %v649
  %v658 = vsub.f32 %v654, %v650
  %v659 = vmul.f32 %v439, %v643
  %v660 = vmul.f32 %v442, %v644
  %v661 = vmul.f32 %v447, %v645
  %v662 = vmul.f32 %v450, %v646
  %v663 = vadd.f32 %v659, %v655
  %v664 = vadd.f32 %v660, %v656
  %v665 = vadd.f32 %v661, %v657
  %v666 = vadd.f32 %v662, %v658
  %v667 = vmax.f32 %v663, 0.0
  %v668 = vmax.f32 %v664, 0.0
  %v669 = vmax.f32 %v665, 0.0
  %v670 = vmax.f32 %v666, 0.0
  %v671 = vrot.slane %v667, 7
  %v672 = vrot.slane %v668, 7
  %v673 = vrot.slane %v669, 7
  %v674 = vrot.slane %v670, 7
  %v675 = vsel %vm83, %v673, %v674
  %v676 = vsel %vm83, %v672, %v673
  %v677 = vsel %vm83, %v671, %v672
  %v678 = vsel %vm83, %v674, %v671
  %v679 = vsel %vm108, %v678, 0.0
  %v680 = vsel %vm109, %v677, 0.0
  %v681 = vsel %vm110, %v676, 0.0
  %v682 = vsel %vm111, %v675, 0.0
  %v683 = vrot.slane %v667, 1
  %v684 = vrot.slane %v668, 1
  %v685 = vrot.slane %v669, 1
  %v686 = vrot.slane %v670, 1
  %v687 = vsel %vm120, %v685, %v686
  %v688 = vsel %vm120, %v684, %v685
  %v689 = vsel %vm120, %v683, %v684
  %v690 = vsel %vm120, %v686, %v683
  %v691 = vsel %vm145, %v689, 0.0
  %v692 = vsel %vm146, %v688, 0.0
  %v693 = vsel %vm147, %v687, 0.0
  %v694 = vsel %vm148, %v690, 0.0
  %v695 = vpack.c.bf16 %v680, %v679
  %v696 = vpack.c.bf16 %v668, %v667
  %v697 = vpack.c.bf16 %v692, %v691
  %v698 = vpack.c.bf16 %v682, %v681
  %v699 = vpack.c.bf16 %v670, %v669
  %v700 = vpack.c.bf16 %v694, %v693
  %v701 = vld [vmem:[%s2] sm:$0xf]
  %v702 = vld [vmem:[%s2 + $0x4] sm:$0xf]
  %v703 = vld [vmem:[%s2 + $0x8] sm:$0xf]
  %v704 = vld [vmem:[%s2 + $0xc] sm:$0xf]
  %v705 = vld [vmem:[%s2 + $0x10] sm:$0xf]
  %v706 = vld [vmem:[%s2 + $0x14] sm:$0xf]
  %v707 = vld [vmem:[%s2 + $0x18] sm:$0xf]
  %v708 = vld [vmem:[%s2 + $0x1c] sm:$0xf]
  %v709 = vld [vmem:[%s2 + $0x20] sm:$0xf]
  %v710 = vld [vmem:[%s2 + $0x24] sm:$0xf]
  %v711 = vld [vmem:[%s2 + $0x28] sm:$0xf]
  %v712 = vld [vmem:[%s2 + $0x2c] sm:$0xf]
  %v713 = vld [vmem:[%s2 + $0x30] sm:$0xf]
  %v714 = vld [vmem:[%s2 + $0x34] sm:$0xf]
  %v715 = vld [vmem:[%s2 + $0x38] sm:$0xf]
  %v716 = vld [vmem:[%s2 + $0x3c] sm:$0xf]
  %v717 = vld [vmem:[%s2 + $0x40] sm:$0xf]
  %v718 = vld [vmem:[%s2 + $0x44] sm:$0xf]
  %v719 = vld [vmem:[%s2 + $0x48] sm:$0xf]
  %v720 = vld [vmem:[%s2 + $0x4c] sm:$0xf]
  %v721 = vld [vmem:[%s2 + $0x50] sm:$0xf]
  %v722 = vld [vmem:[%s2 + $0x54] sm:$0xf]
  %v723 = vld [vmem:[%s2 + $0x58] sm:$0xf]
  %v724 = vld [vmem:[%s2 + $0x5c] sm:$0xf]
  %v725 = vld [vmem:[%s2 + $0x60] sm:$0xf]
  %v726 = vld [vmem:[%s2 + $0x64] sm:$0xf]
  %v727 = vld [vmem:[%s2 + $0x68] sm:$0xf]
  %v728 = vld [vmem:[%s2 + $0x6c] sm:$0xf]
  %v729 = vld [vmem:[%s2 + $0x70] sm:$0xf]
  %v730 = vld [vmem:[%s2 + $0x74] sm:$0xf]
  %v731 = vld [vmem:[%s2 + $0x78] sm:$0xf]
  %v732 = vld [vmem:[%s2 + $0x7c] sm:$0xf]
  %v733 = vld [vmem:[%s2 + $0x80] sm:$0xf]
  %v734 = vld [vmem:[%s2 + $0x84] sm:$0xf]
  %v735 = vld [vmem:[%s2 + $0x88] sm:$0xf]
  %v736 = vld [vmem:[%s2 + $0x8c] sm:$0xf]
  %v737 = vld [vmem:[%s2 + $0x90] sm:$0xf]
  %v738 = vld [vmem:[%s2 + $0x94] sm:$0xf]
  %v739 = vld [vmem:[%s2 + $0x98] sm:$0xf]
  %v740 = vld [vmem:[%s2 + $0x9c] sm:$0xf]
  %v741 = vld [vmem:[%s2 + $0xa0] sm:$0xf]
  %v742 = vld [vmem:[%s2 + $0xa4] sm:$0xf]
  %v743 = vld [vmem:[%s2 + $0xa8] sm:$0xf]
  %v744 = vld [vmem:[%s2 + $0xac] sm:$0xf]
  %v745 = vld [vmem:[%s2 + $0xb0] sm:$0xf]
  %v746 = vld [vmem:[%s2 + $0xb4] sm:$0xf]
  %v747 = vld [vmem:[%s2 + $0xb8] sm:$0xf]
  %v748 = vld [vmem:[%s2 + $0xbc] sm:$0xf]
  %v749 = vlaneseq
  %v750 = vshrl.u32 %v749, 7
  %v751 = vsub.s32 3, %v750
  %v752 = vrot.slane %v25, %v751
  %v801 = vunpack.c.l.b16 %v701
  %v802 = vunpack.c.l.b16 %v702
  %v803 = vunpack.c.l.b16 %v703
  %v804 = vunpack.c.l.b16 %v704
  %v805 = vunpack.c.l.b16 %v705
  %v806 = vunpack.c.l.b16 %v706
  %v807 = vunpack.c.l.b16 %v707
  %v808 = vunpack.c.l.b16 %v708
  %v809 = vunpack.c.l.b16 %v709
  %v810 = vunpack.c.l.b16 %v710
  %v811 = vunpack.c.l.b16 %v711
  %v812 = vunpack.c.l.b16 %v712
  %v813 = vunpack.c.l.b16 %v713
  %v814 = vunpack.c.l.b16 %v714
  %v815 = vunpack.c.l.b16 %v715
  %v816 = vunpack.c.l.b16 %v716
  %v817 = vunpack.c.l.b16 %v717
  %v818 = vunpack.c.l.b16 %v718
  %v819 = vunpack.c.l.b16 %v719
  %v820 = vunpack.c.l.b16 %v720
  %v821 = vunpack.c.l.b16 %v721
  %v822 = vunpack.c.l.b16 %v722
  %v823 = vunpack.c.l.b16 %v723
  %v824 = vunpack.c.l.b16 %v724
  %v825 = vunpack.c.l.b16 %v725
  %v826 = vunpack.c.l.b16 %v726
  %v827 = vunpack.c.l.b16 %v727
  %v828 = vunpack.c.l.b16 %v728
  %v829 = vunpack.c.l.b16 %v729
  %v830 = vunpack.c.l.b16 %v730
  %v831 = vunpack.c.l.b16 %v731
  %v832 = vunpack.c.l.b16 %v732
  %v833 = vunpack.c.l.b16 %v733
  %v834 = vunpack.c.l.b16 %v734
  %v835 = vunpack.c.l.b16 %v735
  %v836 = vunpack.c.l.b16 %v736
  %v837 = vunpack.c.l.b16 %v737
  %v838 = vunpack.c.l.b16 %v738
  %v839 = vunpack.c.l.b16 %v739
  %v840 = vunpack.c.l.b16 %v740
  %v841 = vunpack.c.l.b16 %v741
  %v842 = vunpack.c.l.b16 %v742
  %v843 = vunpack.c.l.b16 %v743
  %v844 = vunpack.c.l.b16 %v744
  %v845 = vunpack.c.l.b16 %v745
  %v846 = vunpack.c.l.b16 %v746
  %v847 = vunpack.c.l.b16 %v747
  %v848 = vunpack.c.l.b16 %v748
  %v849 = vpack.c.b16 %v802, %v801
  %v850 = vpack.c.b16 %v804, %v803
  %v851 = vpack.c.b16 %v806, %v805
  %v852 = vpack.c.b16 %v808, %v807
  %v853 = vpack.c.b16 %v810, %v809
  %v854 = vpack.c.b16 %v812, %v811
  %v855 = vpack.c.b16 %v814, %v813
  %v856 = vpack.c.b16 %v816, %v815
  %v857 = vpack.c.b16 %v818, %v817
  %v858 = vpack.c.b16 %v820, %v819
  %v859 = vpack.c.b16 %v822, %v821
  %v860 = vpack.c.b16 %v824, %v823
  %v861 = vpack.c.b16 %v826, %v825
  %v862 = vpack.c.b16 %v828, %v827
  %v863 = vpack.c.b16 %v830, %v829
  %v864 = vpack.c.b16 %v832, %v831
  %v865 = vpack.c.b16 %v834, %v833
  %v866 = vpack.c.b16 %v836, %v835
  %v867 = vpack.c.b16 %v838, %v837
  %v868 = vpack.c.b16 %v840, %v839
  %v869 = vpack.c.b16 %v842, %v841
  %v870 = vpack.c.b16 %v844, %v843
  %v871 = vpack.c.b16 %v846, %v845
  %v872 = vpack.c.b16 %v848, %v847
  %897 = vmatprep.subr.bf16.mxu0 0
  %898 = vmatpush1.bf16.msra.mxu0 %v849
  %899 = vmatprep.subr.bf16.mxu0 0
  %900 = vmatpush1.bf16.msra.mxu0 %v850
  %901 = vmatprep.subr.bf16.mxu0 0
  %902 = vmatpush1.bf16.msra.mxu0 %v851
  %903 = vmatprep.subr.bf16.mxu0 0
  %904 = vmatpush1.bf16.msra.mxu0 %v852
  %905 = vmatprep.subr.bf16.mxu0 0
  %906 = vmatpush1.bf16.msra.mxu0 %v853
  %907 = vmatprep.subr.bf16.mxu0 0
  %908 = vmatpush1.bf16.msra.mxu0 %v854
  %909 = vmatprep.subr.bf16.mxu0 0
  %910 = vmatpush1.bf16.msra.mxu0 %v855
  %911 = vmatprep.subr.bf16.mxu0 0
  %912 = vmatpush1.bf16.msra.mxu0 %v856
  %913 = vmatprep.subr.bf16.mxu0 0
  %914 = vmatpush1.bf16.msra.mxu0 %v857
  %915 = vmatprep.subr.bf16.mxu0 0
  %916 = vmatpush1.bf16.msra.mxu0 %v858
  %917 = vmatprep.subr.bf16.mxu0 0
  %918 = vmatpush1.bf16.msra.mxu0 %v859
  %919 = vmatprep.subr.bf16.mxu0 0
  %920 = vmatpush1.bf16.msra.mxu0 %v860
  %921 = vmatprep.subr.bf16.mxu0 0
  %922 = vmatpush1.bf16.msra.mxu0 %v861
  %923 = vmatprep.subr.bf16.mxu0 0
  %924 = vmatpush1.bf16.msra.mxu0 %v862
  %925 = vmatprep.subr.bf16.mxu0 0
  %926 = vmatpush1.bf16.msra.mxu0 %v863
  %927 = vmatprep.subr.bf16.mxu0 0
  %928 = vmatpush1.bf16.msra.mxu0 %v864
  %929 = vmatprep.mubr.bf16.mxu0 %v696
  %930 = vmatmul.mubr.bf16.gmra.mrb[0].mxu0 %v695
  %v931 = vpop.f32.mrb[0].mxu0
  %v932 = vadd.f32 %v752, %v931
  %v933 = vpop.f32.mrb[0].mxu0
  %v934 = vpop.f32.mrb[0].mxu0
  %v935 = vadd.f32 %v752, %v934
  %v936 = vpop.f32.mrb[0].mxu0
  %937 = vmatprep.mubr.bf16.mxu0 %v699
  %938 = vmatmul.mubr.bf16.gmra.mrb[0].mxu0 %v698
  %v939 = vpop.f32.mrb[0].mxu0
  %v940 = vadd.f32 %v752, %v939
  %v941 = vpop.f32.mrb[0].mxu0
  %v942 = vpop.f32.mrb[0].mxu0
  %v943 = vadd.f32 %v752, %v942
  %v944 = vpop.f32.mrb[0].mxu0
  %945 = vdwg.mxu0
  %946 = vmatprep.subr.bf16.mxu0 0
  %947 = vmatpush1.bf16.msra.mxu0 %v865
  %948 = vmatprep.subr.bf16.mxu0 0
  %949 = vmatpush1.bf16.msra.mxu0 %v866
  %950 = vmatprep.subr.bf16.mxu0 0
  %951 = vmatpush1.bf16.msra.mxu0 %v867
  %952 = vmatprep.subr.bf16.mxu0 0
  %953 = vmatpush1.bf16.msra.mxu0 %v868
  %954 = vmatprep.subr.bf16.mxu0 0
  %955 = vmatpush1.bf16.msra.mxu0 %v869
  %956 = vmatprep.subr.bf16.mxu0 0
  %957 = vmatpush1.bf16.msra.mxu0 %v870
  %958 = vmatprep.subr.bf16.mxu0 0
  %959 = vmatpush1.bf16.msra.mxu0 %v871
  %960 = vmatprep.subr.bf16.mxu0 0
  %961 = vmatpush1.bf16.msra.mxu0 %v872
  %962 = vmatprep.subr.bf16.mxu0 0
  %963 = vmatpush1.bf16.msra.mxu0 0
  %964 = vmatprep.subr.bf16.mxu0 0
  %965 = vmatpush1.bf16.msra.mxu0 0
  %966 = vmatprep.subr.bf16.mxu0 0
  %967 = vmatpush1.bf16.msra.mxu0 0
  %968 = vmatprep.subr.bf16.mxu0 0
  %969 = vmatpush1.bf16.msra.mxu0 0
  %970 = vmatprep.subr.bf16.mxu0 0
  %971 = vmatpush1.bf16.msra.mxu0 0
  %972 = vmatprep.subr.bf16.mxu0 0
  %973 = vmatpush1.bf16.msra.mxu0 0
  %974 = vmatprep.subr.bf16.mxu0 0
  %975 = vmatpush1.bf16.msra.mxu0 0
  %976 = vmatprep.subr.bf16.mxu0 0
  %977 = vmatpush1.bf16.msra.mxu0 0
  %978 = vmatprep.mubr.bf16.mxu0 0
  %979 = vmatmul.mubr.bf16.gmra.mrb[0].mxu0 %v697
  %v980 = vpop.f32.mrb[0].mxu0
  %v981 = vadd.f32 %v932, %v980
  %v982 = vpop.f32.mrb[0].mxu0
  %v983 = vpop.f32.mrb[0].mxu0
  %v984 = vadd.f32 %v935, %v983
  %v985 = vpop.f32.mrb[0].mxu0
  %986 = vmatprep.mubr.bf16.mxu0 0
  %987 = vmatmul.mubr.bf16.gmra.mrb[0].mxu0 %v700
  %v988 = vpop.f32.mrb[0].mxu0
  %v989 = vadd.f32 %v940, %v988
  %v990 = vpop.f32.mrb[0].mxu0
  %v991 = vpop.f32.mrb[0].mxu0
  %v992 = vadd.f32 %v943, %v991
  %v993 = vpop.f32.mrb[0].mxu0
  %994 = vdwg.mxu0
  %v995 = vmul.f32 %v981, %v981
  %v996 = vmul.f32 %v984, %v984
  %v997 = vmul.f32 %v989, %v989
  %v998 = vmul.f32 %v992, %v992
  %999 = vmatprep.subr.mxu0 0.0
  %1000 = vmatpush1.msra.mxu0 %v981
  %1001 = vmatprep.subr.mxu0 0.0
  %1002 = vmatpush1.msra.mxu0 %v984
  %1003 = vmatprep.subr.mxu0 0.0
  %1004 = vmatpush1.msra.mxu0 %v989
  %1005 = vmatprep.subr.mxu0 0.0
  %1006 = vmatpush1.msra.mxu0 %v992
  %1007 = vmatprep.subr.mxu0 0.0
  %1008 = vmatpush1.msra.mxu0 %v995
  %1009 = vmatprep.subr.mxu0 0.0
  %1010 = vmatpush1.msra.mxu0 %v996
  %1011 = vmatprep.subr.mxu0 0.0
  %1012 = vmatpush1.msra.mxu0 %v997
  %1013 = vmatprep.subr.mxu0 0.0
  %1014 = vmatpush1.msra.mxu0 %v998
  %1015 = vmatprep.subr.mxu0 0.0
  %1016 = vmatpush1.msra.mxu0 0.0
  %1017 = vmatprep.subr.mxu0 0.0
  %1018 = vmatpush1.msra.mxu0 0.0
  %1019 = vmatprep.subr.mxu0 0.0
  %1020 = vmatpush1.msra.mxu0 0.0
  %1021 = vmatprep.subr.mxu0 0.0
  %1022 = vmatpush1.msra.mxu0 0.0
  %1023 = vmatprep.subr.mxu0 0.0
  %1024 = vmatpush1.msra.mxu0 0.0
  %1025 = vmatprep.subr.mxu0 0.0
  %1026 = vmatpush1.msra.mxu0 0.0
  %1027 = vmatprep.subr.mxu0 0.0
  %1028 = vmatpush1.msra.mxu0 0.0
  %1029 = vmatprep.subr.mxu0 0.0
  %1030 = vmatpush1.msra.mxu0 0.0
  %1031 = vmatprep.subr.mxu0 0.0
  %1032 = vmatpush1.msra.mxu0 0.0
  %1033 = vmatprep.subr.mxu0 0.0
  %1034 = vmatpush1.msra.mxu0 0.0
  %1035 = vmatprep.subr.mxu0 0.0
  %1036 = vmatpush1.msra.mxu0 0.0
  %1037 = vmatprep.subr.mxu0 0.0
  %1038 = vmatpush1.msra.mxu0 0.0
  %1039 = vmatprep.subr.mxu0 0.0
  %1040 = vmatpush1.msra.mxu0 0.0
  %1041 = vmatprep.subr.mxu0 0.0
  %1042 = vmatpush1.msra.mxu0 0.0
  %1043 = vmatprep.subr.mxu0 0.0
  %1044 = vmatpush1.msra.mxu0 0.0
  %1045 = vmatprep.subr.mxu0 0.0
  %1046 = vmatpush1.msra.mxu0 0.0
  %1047 = vmatprep.subr.mxu0 0.0
  %1048 = vmatpush1.msra.mxu0 0.0
  %1049 = vmatprep.subr.mxu0 0.0
  %1050 = vmatpush1.msra.mxu0 0.0
  %1051 = vmatprep.subr.mxu0 0.0
  %1052 = vmatpush1.msra.mxu0 0.0
  %1053 = vmatprep.subr.mxu0 0.0
  %1054 = vmatpush1.msra.mxu0 0.0
  %1055 = vmatprep.subr.mxu0 0.0
  %1056 = vmatpush1.msra.mxu0 0.0
  %1057 = vmatprep.subr.mxu0 0.0
  %1058 = vmatpush1.msra.mxu0 0.0
  %1059 = vmatprep.subr.mxu0 0.0
  %1060 = vmatpush1.msra.mxu0 0.0
  %1061 = vmatprep.subr.mxu0 0.0
  %1062 = vmatpush1.msra.mxu0 0.0
  %1063 = vmatprep.mubr.f32.mxu0 0.0
  %1064 = vmatmul.mubr.f32.gmra.mrb[0].mxu0 %v467
  %v1065 = vpop.f32.mrb[0].mxu0
  %v1066 = vadd.f32 0.0, %v1065
  %v1067 = vpop.f32.mrb[0].mxu0
  %1068 = vmatprep.mubr.f32.mxu0 0.0
  %1069 = vmatmul.mubr.f32.gmra.mrb[0].mxu0 %v470
  %v1070 = vpop.f32.mrb[0].mxu0
  %v1071 = vadd.f32 0.0, %v1070
  %v1072 = vpop.f32.mrb[0].mxu0
  %1073 = vmatprep.mubr.f32.mxu0 0.0
  %1074 = vmatmul.mubr.f32.gmra.mrb[0].mxu0 %v473
  %v1075 = vpop.f32.mrb[0].mxu0
  %v1076 = vadd.f32 0.0, %v1075
  %v1077 = vpop.f32.mrb[0].mxu0
  %1078 = vmatprep.mubr.f32.mxu0 0.0
  %1079 = vmatmul.mubr.f32.gmra.mrb[0].mxu0 %v476
  %v1080 = vpop.f32.mrb[0].mxu0
  %v1081 = vadd.f32 0.0, %v1080
  %v1082 = vpop.f32.mrb[0].mxu0
  %1083 = vmatprep.mubr.f32.mxu0 0.0
  %1084 = vmatmul.mubr.f32.gmra.mrb[0].mxu0 %v479
  %v1085 = vpop.f32.mrb[0].mxu0
  %v1086 = vadd.f32 0.0, %v1085
  %v1087 = vpop.f32.mrb[0].mxu0
  %1088 = vmatprep.mubr.f32.mxu0 0.0
  %1089 = vmatmul.mubr.f32.gmra.mrb[0].mxu0 %v482
  %v1090 = vpop.f32.mrb[0].mxu0
  %v1091 = vadd.f32 0.0, %v1090
  %v1092 = vpop.f32.mrb[0].mxu0
  %1093 = vmatprep.mubr.f32.mxu0 0.0
  %1094 = vmatmul.mubr.f32.gmra.mrb[0].mxu0 %v485
  %v1095 = vpop.f32.mrb[0].mxu0
  %v1096 = vadd.f32 0.0, %v1095
  %v1097 = vpop.f32.mrb[0].mxu0
  %1098 = vmatprep.mubr.f32.mxu0 0.0
  %1099 = vmatmul.mubr.f32.gmra.mrb[0].mxu0 %v488
  %v1100 = vpop.f32.mrb[0].mxu0
  %v1101 = vadd.f32 0.0, %v1100
  %v1102 = vpop.f32.mrb[0].mxu0
  %1103 = vdwg.mxu0
  %1104 = vadd.xlane.f32.xlu0 %v1066
  %v1105 = vpop.xlane.xlu0 %1104
  %1106 = vadd.xlane.f32.xlu0 %v1071
  %v1107 = vpop.xlane.xlu0 %1106
  %1108 = vadd.xlane.f32.xlu0 %v1076
  %v1109 = vpop.xlane.xlu0 %1108
  %1110 = vadd.xlane.f32.xlu0 %v1081
  %v1111 = vpop.xlane.xlu0 %1110
  %1112 = vadd.xlane.f32.xlu0 %v1086
  %v1113 = vpop.xlane.xlu0 %1112
  %1114 = vadd.xlane.f32.xlu0 %v1091
  %v1115 = vpop.xlane.xlu0 %1114
  %1116 = vadd.xlane.f32.xlu0 %v1096
  %v1117 = vpop.xlane.xlu0 %1116
  %1118 = vadd.xlane.f32.xlu0 %v1101
  %v1119 = vpop.xlane.xlu0 %1118
  %v1120 = vmul.f32 %v1105, 0.00048828125
  %v1121 = vmul.f32 %v1107, 0.00048828125
  %v1122 = vmul.f32 %v1109, 0.00048828125
  %v1123 = vmul.f32 %v1111, 0.00048828125
  %v1124 = vmul.f32 %v1113, 0.00048828125
  %v1125 = vmul.f32 %v1115, 0.00048828125
  %v1126 = vmul.f32 %v1117, 0.00048828125
  %v1127 = vmul.f32 %v1119, 0.00048828125
  %v1128 = vmul.f32 %v1120, %v1120
  %v1129 = vmul.f32 %v1121, %v1121
  %v1130 = vmul.f32 %v1122, %v1122
  %v1131 = vmul.f32 %v1123, %v1123
  %v1132 = vsub.f32 %v1124, %v1128
  %v1133 = vsub.f32 %v1125, %v1129
  %v1134 = vsub.f32 %v1126, %v1130
  %v1135 = vsub.f32 %v1127, %v1131
  %v1136 = vmax.f32 %v1132, 0.0
  %v1137 = vmax.f32 %v1133, 0.0
  %v1138 = vmax.f32 %v1134, 0.0
  %v1139 = vmax.f32 %v1135, 0.0
  %v1140 = vadd.f32 %v1136, 1e-05
  %v1141 = vadd.f32 %v1137, 1e-05
  %v1142 = vadd.f32 %v1138, 1e-05
  %v1143 = vadd.f32 %v1139, 1e-05
  %v1144 = vrsqrt.pop %v1140
  %v1145 = vrsqrt.pop %v1141
  %v1146 = vrsqrt.pop %v1142
  %v1147 = vrsqrt.pop %v1143
  %v1148 = vlaneseq
  %v1149 = vshrl.u32 %v1148, 7
  %v1150 = vsub.s32 4, %v1149
  %v1151 = vrot.slane %v25, %v1150
  %v1152 = vmul.f32 %v1144, %v1151
  %v1153 = vmul.f32 %v1145, %v1151
  %v1154 = vmul.f32 %v1146, %v1151
  %v1155 = vmul.f32 %v1147, %v1151
  %v1156 = vmul.f32 %v1120, %v1152
  %v1157 = vmul.f32 %v1121, %v1153
  %v1158 = vmul.f32 %v1122, %v1154
  %v1159 = vmul.f32 %v1123, %v1155
  %v1160 = vlaneseq
  %v1161 = vshrl.u32 %v1160, 7
  %v1162 = vsub.s32 5, %v1161
  %v1163 = vrot.slane %v25, %v1162
  %v1164 = vsub.f32 %v1163, %v1156
  %v1165 = vsub.f32 %v1163, %v1157
  %v1166 = vsub.f32 %v1163, %v1158
  %v1167 = vsub.f32 %v1163, %v1159
  %v1168 = vmul.f32 %v981, %v1152
  %v1169 = vmul.f32 %v984, %v1153
  %v1170 = vmul.f32 %v989, %v1154
  %v1171 = vmul.f32 %v992, %v1155
  %v1172 = vadd.f32 %v1168, %v1164
  %v1173 = vadd.f32 %v1169, %v1165
  %v1174 = vadd.f32 %v1170, %v1166
  %v1175 = vadd.f32 %v1171, %v1167
  %v1176 = vmax.f32 %v1172, 0.0
  %v1177 = vmax.f32 %v1173, 0.0
  %v1178 = vmax.f32 %v1174, 0.0
  %v1179 = vmax.f32 %v1175, 0.0
  %v1180 = vadd.f32 %v21, %v1176
  %v1181 = vadd.f32 %v22, %v1177
  %v1182 = vadd.f32 %v23, %v1178
  %v1183 = vadd.f32 %v24, %v1179
  %v1184 = vmax.f32 %v1180, 0.0
  %v1185 = vmax.f32 %v1181, 0.0
  %v1186 = vmax.f32 %v1182, 0.0
  %v1187 = vmax.f32 %v1183, 0.0
  %1188 = vst [vmem:[%s5] sm:$0xff] %v1184
  %1189 = vst [vmem:[%s5 + $0x8] sm:$0xff] %v1185
  %1190 = vst [vmem:[%s5 + $0x10] sm:$0xff] %v1186
  %1191 = vst [vmem:[%s5 + $0x18] sm:$0xff] %v1187
  // Predicated region
  $region22: #{residual_block_pallas.1} parent=0 // pred_check
    _
  $region23: #{residual_block_pallas.1} parent=0 // pred_check_branch
    %1193 = sbr.rel (0) target = $region25
  $region24: #{residual_block_pallas.1} parent=0 // pred_region
    _
  $region25: #{residual_block_pallas.1} parent=0 // pred_fallthru
    _
  // Predicated region
  $region26: #{residual_block_pallas.1} parent=0 // pred_check
    _
  $region27: #{residual_block_pallas.1} parent=0 // pred_check_branch
    %1195 = sbr.rel (0) target = $region29
  $region28: #{residual_block_pallas.1} parent=0 // pred_region
    _
  $region29: #{residual_block_pallas.1} parent=0 // pred_fallthru
    _

</llo_original>
